<compile_context>
chip_gen: v7x
topology: tpu7x:2x2x1
jax: 0.10.0
libtpu: 0.0.40
codegen_flags: <defaults>
</compile_context>

<pallas_src>
import jax
import jax.numpy as jnp
from jax.experimental import pallas as pl
from jax.experimental.pallas import tpu as pltpu


def _lifting_kernel(x_ref, o_ref):
    # x_ref: (Bn, Bs, 128) VMEM tile
    # o_ref: (Bn, 2, Bs, 128) VMEM tile; [:,0]=relu(x), [:,1]=-relu(-x)
    x = x_ref[...]
    zero = jnp.zeros((), x.dtype)
    # Note: min(x, 0) returns +0.0 where -relu(-x) gives -0.0; numerically equal.
    o_ref[:, 0, :, :] = jnp.maximum(x, zero)
    o_ref[:, 1, :, :] = jnp.minimum(x, zero)


def lifting_layer_multid(x):
    """x: (N, C, H, W) -> (N, 2C, H, W), matching the PyTorch module."""
    N, C, H, W = x.shape
    K = C * H * W
    L = 128  # lane width

    if K % L != 0:
        # TODO(synk): shapes with C*H*W not a multiple of 128 fall back to XLA.
        return jnp.concatenate([jnp.maximum(x, 0), jnp.minimum(x, 0)], axis=1)

    S = K // L
    x3 = x.reshape(N, S, L)  # free reshape (contiguous)

    # Tile sizing: ~2 MiB input tile => ~12 MiB resident with double buffering,
    # fits default scoped VMEM on v5e/v6e/v7x without raising vmem_limit_bytes.
    itemsize = jnp.dtype(x.dtype).itemsize
    target_bytes = 2 * 1024 * 1024
    row_bytes = S * L * itemsize
    if row_bytes <= target_bytes:
        Bs = S
        Bn = int(max(1, min(N, target_bytes // row_bytes)))
    else:
        Bn = 1
        Bs = int(min(S, max(8, (target_bytes // (L * itemsize)) // 8 * 8)))

    grid = (pl.cdiv(N, Bn), pl.cdiv(S, Bs))

    out4 = pl.pallas_call(
        _lifting_kernel,
        out_shape=jax.ShapeDtypeStruct((N, 2, S, L), x.dtype),
        grid_spec=pltpu.PrefetchScalarGridSpec(
            num_scalar_prefetch=0,
            grid=grid,
            in_specs=[pl.BlockSpec((Bn, Bs, L), lambda i, j: (i, j, 0))],
            out_specs=pl.BlockSpec((Bn, 2, Bs, L), lambda i, j: (i, 0, j, 0)),
        ),
        compiler_params=pltpu.CompilerParams(
            dimension_semantics=("parallel", "parallel")),
    )(x3)

    # (N, 2, S, 128) is contiguous-identical to (N, 2C, H, W): free reshape.
    return out4.reshape(N, 2 * C, H, W)


def _reference(x):
    # Pure-JAX reference mirroring the PyTorch forward exactly.
    return jnp.concatenate(
        [jax.nn.relu(x), -1.0 * jax.nn.relu(-1.0 * x)], axis=1)


if __name__ == "__main__":
    key = jax.random.PRNGKey(0)
    # Small NCHW input consistent with the module's conv-style usage.
    x = jax.random.normal(key, (2, 4, 16, 16), dtype=jnp.float32)

    out = jax.block_until_ready(lifting_layer_multid(x))
    ref = _reference(x)

    assert out.shape == (2, 8, 16, 16), out.shape
    assert jnp.allclose(out, ref, atol=0.0, rtol=0.0), "mismatch vs reference"

    print("KERNEL_OK")
</pallas_src>

<mosaic_0001>
module attributes {stable_mosaic.version = 11 : i64} {
  func.func @_lifting_kernel(%arg0: i32, %arg1: i32, %arg2: memref<2x8x128xf32, #tpu.memory_space<vmem>>, %arg3: memref<2x2x8x128xf32, #tpu.memory_space<vmem>>) attributes {dimension_semantics = [#tpu.dimension_semantics<parallel>, #tpu.dimension_semantics<parallel>], iteration_bounds = array<i64: 1, 1>, scalar_prefetch = 0 : i64, scratch_operands = 0 : i64, tpu.core_type = #tpu.core_type<tc>, window_params = [{transform_indices = @transform_0, window_bounds = array<i64: 2, 8, 128>}, {transform_indices = @transform_1, window_bounds = array<i64: 2, 2, 8, 128>}]} {
    %c0 = arith.constant 0 : index
    %c0_0 = arith.constant 0 : index
    %c0_1 = arith.constant 0 : index
    %0 = vector.load %arg2[%c0, %c0_0, %c0_1] : memref<2x8x128xf32, #tpu.memory_space<vmem>>, vector<2x8x128xf32>
    %cst = arith.constant 0.000000e+00 : f32
    %1 = vector.broadcast %cst : f32 to vector<2x8x128xf32>
    %2 = arith.maximumf %0, %1 : vector<2x8x128xf32>
    %c0_2 = arith.constant 0 : index
    %c0_3 = arith.constant 0 : index
    %c0_4 = arith.constant 0 : index
    %c0_5 = arith.constant 0 : index
    %3 = vector.load %arg3[%c0_2, %c0_3, %c0_4, %c0_5] : memref<2x2x8x128xf32, #tpu.memory_space<vmem>>, vector<2x1x8x128xf32>
    %4 = vector.shape_cast %3 : vector<2x1x8x128xf32> to vector<2x8x128xf32>
    %5 = vector.shape_cast %2 : vector<2x8x128xf32> to vector<2x1x8x128xf32>
    tpu.vector_store %arg3[%c0_2, %c0_3, %c0_4, %c0_5], %5 {strides = array<i32>} : memref<2x2x8x128xf32, #tpu.memory_space<vmem>>, vector<2x1x8x128xf32>,
    %cst_6 = arith.constant 0.000000e+00 : f32
    %6 = vector.broadcast %cst_6 : f32 to vector<2x8x128xf32>
    %7 = arith.minimumf %0, %6 : vector<2x8x128xf32>
    %c0_7 = arith.constant 0 : index
    %c1 = arith.constant 1 : index
    %c0_8 = arith.constant 0 : index
    %c0_9 = arith.constant 0 : index
    %8 = vector.load %arg3[%c0_7, %c1, %c0_8, %c0_9] : memref<2x2x8x128xf32, #tpu.memory_space<vmem>>, vector<2x1x8x128xf32>
    %9 = vector.shape_cast %8 : vector<2x1x8x128xf32> to vector<2x8x128xf32>
    %10 = vector.shape_cast %7 : vector<2x8x128xf32> to vector<2x1x8x128xf32>
    tpu.vector_store %arg3[%c0_7, %c1, %c0_8, %c0_9], %10 {strides = array<i32>} : memref<2x2x8x128xf32, #tpu.memory_space<vmem>>, vector<2x1x8x128xf32>,
    return
  }
  func.func @transform_0(%arg0: i32, %arg1: i32) -> (i32, i32, i32) {
    %c0_i32 = arith.constant 0 : i32
    %c0_i32_0 = arith.constant 0 : i32
    return %arg0, %arg1, %c0_i32 : i32, i32, i32
  }
  func.func @transform_1(%arg0: i32, %arg1: i32) -> (i32, i32, i32, i32) {
    %c0_i32 = arith.constant 0 : i32
    %c0_i32_0 = arith.constant 0 : i32
    %c0_i32_1 = arith.constant 0 : i32
    return %arg0, %c0_i32, %arg1, %c0_i32_0 : i32, i32, i32, i32
  }
}

</mosaic_0001>

<llo_original>
// kernel: tpu_custom_call.1
$region0: #{tpu_custom_call.1}
  #allocation0 [shape = 'u32[]', space=smem, size = 0x4, offset = 0x4, fixed_abs, tag = 'smem constant byte address 0x4 - core index']
  #allocation1 [shape = 'u32[144,128]{1,0:T(1,128)}', space=vmem, size = 0x12000, scoped, tag = 'internal scratch']
  %s0 = inlined_call_operand.hbm [shape: f32[2,8,128], index: 0, kind: input, shape index: {}]
  %s1 = inlined_call_operand.hbm [shape: f32[2,2,8,128], index: 1, kind: output, shape index: {}]
  %s2 = sld [smem:[#allocation0]]
  $region18: #{tpu_custom_call.1} parent=0
    _
  %s4 = ssub.s32 1, %s2
  %s5 = scalar_select 0, %s4, %s2
  $region1: #{tpu_custom_call.1} parent=0
    #allocation2 [shape = 'u8[8192]{0}', space=vmem, size = 0x2000, scoped, tag = 'input window, operand 0, single buffered']
    #allocation3 [shape = 's32[1]{0}', space=sflag, size = 0x4, scoped, tag = 'scoped memory for tpu_custom_call.1']
    #allocation4 [shape = 's32[1]{0}', space=sflag, size = 0x4, scoped, tag = 'scoped memory for tpu_custom_call.1']
    #allocation5 [shape = 'u8[16384]{0}', space=vmem, size = 0x4000, scoped, tag = 'output window, operand 0, single buffered']
    %6 = vsyncpa [#allocation3], 0
    %7 = vsyncpa [#allocation4], 0
    // Predicated region
    $region2: #{tpu_custom_call.1} parent=1 // pred_check
      _
    $region3: #{tpu_custom_call.1} parent=1 // pred_check_branch
      %9 = sbr.rel (0) target = $region5
    $region4: #{tpu_custom_call.1} parent=1 // pred_region
      %s11 = ssub.s32 256, 256
      %12 = vsyncadd [#allocation3], %s11
      %s13 = sshll.u32 [#allocation2], 4
      %s14 = int_to_ptr.vmem [resolvable:$true] %s13
      %19 = dma.hbm_to_vmem [thread:$0]  %s0, 256, %s14, [#allocation3], 128, 128, 8
    $region5: #{tpu_custom_call.1} parent=1 // pred_fallthru
      _
    // Predicated region
    $region6: #{tpu_custom_call.1} parent=1 // pred_check
      _
    $region7: #{tpu_custom_call.1} parent=1 // pred_check_branch
      %21 = sbr.rel (0) target = $region9
    $region8: #{tpu_custom_call.1} parent=1 // pred_region
      %22 = dma.done [#allocation3], 256
    $region9: #{tpu_custom_call.1} parent=1 // pred_fallthru
      _
    %v23 = vld [vmem:[#allocation2] sm:$0xff]
    %v24 = vld [vmem:[#allocation2 + $0x8] sm:$0xff]
    %v25 = vmax.f32 %v23, 0.0
    %v26 = vmax.f32 %v24, 0.0
    %27 = vst [vmem:[#allocation5] sm:$0xff] %v25
    %28 = vst [vmem:[#allocation5 + $0x10] sm:$0xff] %v26
    %v29 = vmin.f32 %v23, 0.0
    %v30 = vmin.f32 %v24, 0.0
    %s31 = scalar_lea.vmem [#allocation5], 8
    %32 = vst [vmem:[%s31] sm:$0xff] %v29
    %33 = vst [vmem:[%s31 + $0x10] sm:$0xff] %v30
    // Predicated region
    $region10: #{tpu_custom_call.1} parent=1 // pred_check
      _
    $region11: #{tpu_custom_call.1} parent=1 // pred_check_branch
      %35 = sbr.rel (0) target = $region13
    $region12: #{tpu_custom_call.1} parent=1 // pred_region
      %s37 = ssub.s32 512, 512
      %38 = vsyncadd [#allocation4], %s37
      %s39 = sshll.u32 [#allocation5], 4
      %s40 = int_to_ptr.vmem [resolvable:$true] %s39
      %45 = dma.vmem_to_hbm [thread:$0]  %s40, 512, %s1, [#allocation4], 128, 128, 8
    $region13: #{tpu_custom_call.1} parent=1 // pred_fallthru
      _
    // Predicated region
    $region14: #{tpu_custom_call.1} parent=1 // pred_check
      _
    $region15: #{tpu_custom_call.1} parent=1 // pred_check_branch
      %47 = sbr.rel (0) target = $region17
    $region16: #{tpu_custom_call.1} parent=1 // pred_region
      %48 = dma.done [#allocation4], 512
    $region17: #{tpu_custom_call.1} parent=1 // pred_fallthru
      _
    %49 = vsyncpa [#allocation3], 1
    %50 = vsyncpa [#allocation4], 1

</llo_original>
